<compile_context>
chip_gen: v5e
topology: v5e:2x2
jax: 0.10.0
libtpu: 0.0.40
codegen_flags: <defaults>
</compile_context>

<pallas_src>
import functools
import math

import jax
import jax.numpy as jnp
from jax.experimental import pallas as pl
from jax.experimental.pallas import tpu as pltpu


_PI_APPROX = 3.14159265  # the constant hard-coded in the PyTorch module

# mlambda[m](cos) == cos(m * theta): the Chebyshev polynomials from the module.
_CHEBYSHEV = {
    0: lambda c: jnp.ones_like(c),
    1: lambda c: c,
    2: lambda c: 2.0 * c * c - 1.0,
    3: lambda c: (4.0 * c * c - 3.0) * c,
    4: lambda c: (8.0 * c * c - 8.0) * (c * c) + 1.0,
    5: lambda c: ((16.0 * c * c - 20.0) * (c * c) + 5.0) * c,
}


def _round_up(x, mult):
    return (x + mult - 1) // mult * mult


def _ang_margin_kernel(x_ref, w_ref, invw_ref, invx_ref, xlen_ref, label_ref,
                       o_ref, *, inv_lamb1, thresholds, cheb):
    """Computes one (tb, tc) tile of the Ang_Margin output."""
    # Cosine on the MXU (bf16 inputs, f32 accumulation). Row/column norms were
    # computed once in the wrapper and are applied post-matmul as rank-1 scales.
    dot = jnp.dot(x_ref[...], w_ref[...],
                  preferred_element_type=jnp.float32)              # (tb, tc) f32
    inv_xlen = invx_ref[...]                                       # (tb, 1) f32
    xlen = xlen_ref[...]                                           # (tb, 1) f32
    inv_wlen = invw_ref[...]                                       # (1, tc) f32

    cos = jnp.clip(dot * inv_xlen * inv_wlen, -1.0, 1.0)
    cos_x = cos * xlen                                             # plain logits

    lab = label_ref[...]                                           # (tb, 1) i32
    tb, tc = cos.shape
    col = (jax.lax.broadcasted_iota(jnp.int32, (tb, tc), 1)
           + pl.program_id(1) * tc)                                # global class ids
    is_lab = col == lab                                            # (tb, tc) bool

    # Label-column cosine via a masked lane reduce (XLU slot) -> (tb, 1), so the
    # SphereFace margin polynomial runs on a tiny vector, not the whole tile.
    cos_lab = jnp.sum(jnp.where(is_lab, cos, 0.0), axis=-1, keepdims=True)

    # psi(theta) = (-1)^k * cos(m*theta) - 2k, k = floor(m*theta/3.14159265).
    # k is recovered from cosine thresholds (acos is monotone decreasing),
    # so there are no acos/sqrt transcendentals in the kernel at all.
    # TODO(synk): near theta ~= j*pi/m a bf16-level cosine error can flip k by 1
    # (a ~2*||x||/(1+lamb) jump); pass matmul_dtype=float32 if that matters.
    cos_m = cheb(cos_lab)
    k = jnp.zeros_like(cos_lab)
    for thr in thresholds:                                         # unrolled, len == m
        k = k + (cos_lab <= thr).astype(jnp.float32)
    sign = 1.0 - 2.0 * (k - 2.0 * jnp.floor(0.5 * k))              # == (-1)^k
    phi = sign * cos_m - 2.0 * k
    corr = (phi - cos_lab) * (xlen * inv_lamb1)                    # (tb, 1)

    # Logits: cos*||x|| everywhere; label column additionally gets
    # (phi - cos)*||x||/(1 + lamb), selected with a single where.
    o_ref[...] = jnp.where(is_lab, cos_x + corr, cos_x).astype(o_ref.dtype)


def _choose_tiles(B, D, C, mm_itemsize):
    """Pick tiles first (large, lane-dense, 256-aligned), then pad shapes to them."""
    Dp = _round_up(D, 128)
    # Single B tile whenever the batch fits in <= 512 rows: with grid=(B,C) the
    # whole weight is re-streamed once per extra B tile, so collapsing to one
    # B tile saves the dominant input stream outright.
    tb = _round_up(B, 8) if B <= 512 else 512
    budget = 40 * 1024 * 1024          # double-buffered working set; fits v7x 64 MiB
    # Guard against pathologically large D blowing up the resident x tile.
    while tb > 8 and 2 * tb * Dp * mm_itemsize > budget // 2:
        tb = max(8, (tb // 2) // 8 * 8)
    Bp = _round_up(B, tb)
    # Largest 256-aligned C tile that fits the budget (target 1024-2048):
    # weight (bf16, 2x buffered) + output (f32, 2x) + x tile + column norms.
    tc = 128
    for cand in (2048, 1792, 1536, 1280, 1024, 768, 512, 256, 128):
        need = (2 * Dp * cand * mm_itemsize
                + 2 * tb * cand * 4
                + 2 * tb * Dp * mm_itemsize
                + 2 * 8 * cand * 4)
        if need <= budget:
            tc = cand
            break
    # Don't pad tiny class counts all the way up to the target tile.
    tc = min(tc, _round_up(C, 256 if tc >= 256 else 128))
    Cp = _round_up(C, tc)
    need = (2 * Dp * tc * mm_itemsize + 2 * tb * tc * 4
            + 2 * tb * Dp * mm_itemsize + 2 * 8 * tc * 4 + (1 << 20))
    return tb, tc, Bp, Dp, Cp, need


def ang_margin_forward(x, weight, label, *, m=4, it=1,
                       matmul_dtype=jnp.bfloat16):
    """Ang_Margin forward.

    x:      (B, in_features) float
    weight: (in_features, out_features) float   (module layout: (D, C))
    label:  (B,) int, 0 <= label < out_features
    it:     value of the module's step counter *after* this call (module does
            `self.it += 1` before computing lamb; fresh module -> 1).
    """
    x32 = jnp.asarray(x, jnp.float32)
    w32 = jnp.asarray(weight, jnp.float32)
    B, D = x32.shape
    D2, C = w32.shape
    assert D == D2, "weight must be (in_features, out_features)"
    if m not in _CHEBYSHEV:
        raise ValueError(f"m={m} not supported (module supports m in 0..5)")
    # TODO(synk): phiflag=False branch (myphi of acos(theta)) not implemented.

    lamb = max(5.0, 1500.0 / (1.0 + 0.1 * it))
    inv_lamb1 = 1.0 / (1.0 + lamb)
    thresholds = tuple(math.cos(j * _PI_APPROX / m)
                       for j in range(1, m + 1)) if m > 0 else ()

    mm_itemsize = jnp.dtype(matmul_dtype).itemsize
    tb, tc, Bp, Dp, Cp, vmem_need = _choose_tiles(B, D, C, mm_itemsize)

    # Per-row / per-column stats in f32, computed once per call on the
    # unpadded arrays (hoisted out of the kernel's inner C loop).
    x_sumsq = jnp.sum(x32 * x32, axis=1, keepdims=True)            # (B, 1)
    inv_xlen = jax.lax.rsqrt(jnp.maximum(x_sumsq, 1e-24))
    xlen = x_sumsq * inv_xlen                                      # == ||x||
    w_sumsq = jnp.sum(w32 * w32, axis=0, keepdims=True)            # (1, C)
    # The module's renorm(2,1,1e-5)*1e5 rescale cancels against its wlen
    # division, so only the raw column norms are needed.
    inv_wlen = jax.lax.rsqrt(jnp.maximum(w_sumsq, 1e-24))

    # bf16 cast fused with padding (pad the already-cast arrays); padding is a
    # no-op when the shapes are already lane/sublane aligned.
    x_mm = x32.astype(matmul_dtype)
    w_mm = w32.astype(matmul_dtype)
    if (Bp, Dp) != (B, D):
        x_mm = jnp.pad(x_mm, ((0, Bp - B), (0, Dp - D)))
    if (Dp, Cp) != (D, C):
        w_mm = jnp.pad(w_mm, ((0, Dp - D), (0, Cp - C)))
    if Cp != C:
        inv_wlen = jnp.pad(inv_wlen, ((0, 0), (0, Cp - C)), constant_values=1.0)
    lab = jnp.asarray(label, jnp.int32).reshape(B, 1)
    if Bp != B:
        inv_xlen = jnp.pad(inv_xlen, ((0, Bp - B), (0, 0)), constant_values=1.0)
        xlen = jnp.pad(xlen, ((0, Bp - B), (0, 0)), constant_values=1.0)
        lab = jnp.pad(lab, ((0, Bp - B), (0, 0)), constant_values=-1)

    grid = (Bp // tb, Cp // tc)
    kernel = functools.partial(
        _ang_margin_kernel, inv_lamb1=inv_lamb1,
        thresholds=thresholds, cheb=_CHEBYSHEV[m])

    # Advisory cost: x is resident across the inner C axis (read once); the
    # weight is re-streamed once per B tile; no transcendentals in the kernel.
    cost = pl.CostEstimate(
        flops=2 * Bp * Dp * Cp + 10 * Bp * Cp,
        transcendentals=0,
        bytes_accessed=(x_mm.size * mm_itemsize
                        + w_mm.size * mm_itemsize * grid[0]
                        + inv_wlen.size * 4 * grid[0]
                        + (inv_xlen.size + xlen.size + lab.size) * 4
                        + Bp * Cp * 4))

    out_p = pl.pallas_call(
        kernel,
        out_shape=jax.ShapeDtypeStruct((Bp, Cp), jnp.float32),
        grid_spec=pltpu.PrefetchScalarGridSpec(
            num_scalar_prefetch=0,
            grid=grid,
            in_specs=[
                pl.BlockSpec((tb, Dp), lambda i, j: (i, 0)),   # x (bf16), resident over C
                pl.BlockSpec((Dp, tc), lambda i, j: (0, j)),   # weight streamed per C tile
                pl.BlockSpec((1, tc), lambda i, j: (0, j)),    # 1/||w_col|| (precomputed)
                pl.BlockSpec((tb, 1), lambda i, j: (i, 0)),    # 1/||x|| (precomputed)
                pl.BlockSpec((tb, 1), lambda i, j: (i, 0)),    # ||x||  (precomputed)
                pl.BlockSpec((tb, 1), lambda i, j: (i, 0)),    # labels
            ],
            out_specs=pl.BlockSpec((tb, tc), lambda i, j: (i, j)),
        ),
        compiler_params=pltpu.CompilerParams(
            dimension_semantics=("parallel", "parallel"),      # 2-TC sharding on v7x
            vmem_limit_bytes=int(min(max(48 * 1024 * 1024, vmem_need + (8 << 20)),
                                     100 * 1024 * 1024))),
        cost_estimate=cost,
    )(x_mm, w_mm, inv_wlen, inv_xlen, xlen, lab)

    return out_p[:B, :C]   # drop padded rows/classes


def _ang_margin_reference(x, weight, label, *, m=4, it=1):
    """Pure-JAX port of the PyTorch Ang_Margin.forward (phiflag=True path)."""
    x = jnp.asarray(x, jnp.float32)
    w = jnp.asarray(weight, jnp.float32)
    col_norm = jnp.sqrt(jnp.sum(w * w, axis=0, keepdims=True))
    scale = jnp.where(col_norm > 1e-5, 1e-5 / (col_norm + 1e-7), 1.0)
    ww = w * scale * 1e5                                  # renorm(2,1,1e-5).mul(1e5)
    xlen = jnp.sqrt(jnp.sum(x * x, axis=1, keepdims=True))
    wlen = jnp.sqrt(jnp.sum(ww * ww, axis=0, keepdims=True))
    cos_t = jnp.dot(x, ww, precision=jax.lax.Precision.HIGHEST) / xlen / wlen
    cos_t = jnp.clip(cos_t, -1.0, 1.0)
    cos_m_t = _CHEBYSHEV[m](cos_t)
    theta = jnp.arccos(cos_t)
    k = jnp.floor(m * theta / _PI_APPROX)
    sign = jnp.where(jnp.mod(k, 2.0) == 0.0, 1.0, -1.0)
    phi_t = sign * cos_m_t - 2.0 * k
    cos_t = cos_t * xlen
    phi_t = phi_t * xlen
    lamb = max(5.0, 1500.0 / (1.0 + 0.1 * it))
    onehot = jax.nn.one_hot(jnp.asarray(label), cos_t.shape[1], dtype=jnp.float32)
    coef = 1.0 / (1.0 + lamb)
    return cos_t - onehot * cos_t * coef + onehot * phi_t * coef


if __name__ == "__main__":
    # Small shapes consistent with the module: the forward hard-codes 10 classes
    # in the one-hot scatter, so out_features = 10.
    B, in_features, out_features = 8, 32, 10

    key = jax.random.PRNGKey(0)
    kx, kw, kl = jax.random.split(key, 3)

    x = jax.random.normal(kx, (B, in_features), dtype=jnp.float32)
    # Module init: uniform(-1, 1) then column renorm to unit L2 norm.
    w_raw = jax.random.uniform(kw, (in_features, out_features), dtype=jnp.float32,
                               minval=-1.0, maxval=1.0)
    weight = w_raw / jnp.linalg.norm(w_raw, axis=0, keepdims=True)
    label = jax.random.randint(kl, (B,), 0, out_features, dtype=jnp.int32)

    out = ang_margin_forward(x, weight, label, m=4, it=1)
    out = jax.block_until_ready(out)

    ref = _ang_margin_reference(x, weight, label, m=4, it=1)
    assert out.shape == (B, out_features)
    assert bool(jnp.all(jnp.isfinite(out)))
    # bf16 MXU inputs -> small cosine error budget vs the f32 reference.
    err = float(jnp.max(jnp.abs(out - ref)))
    assert jnp.allclose(out, ref, atol=5e-2, rtol=5e-2), f"max abs diff {err}"
    print("KERNEL_OK")
</pallas_src>

<mosaic_0001>
module attributes {stable_mosaic.version = 11 : i64} {
  func.func @_ang_margin_kernel(%arg0: i32, %arg1: i32, %arg2: memref<8x128xbf16, #tpu.memory_space<vmem>>, %arg3: memref<128x256xbf16, #tpu.memory_space<vmem>>, %arg4: memref<1x256xf32, #tpu.memory_space<vmem>>, %arg5: memref<8x1xf32, #tpu.memory_space<vmem>>, %arg6: memref<8x1xf32, #tpu.memory_space<vmem>>, %arg7: memref<8x1xi32, #tpu.memory_space<vmem>>, %arg8: memref<8x256xf32, #tpu.memory_space<vmem>>) attributes {dimension_semantics = [#tpu.dimension_semantics<parallel>, #tpu.dimension_semantics<parallel>], iteration_bounds = array<i64: 1, 1>, scalar_prefetch = 0 : i64, scratch_operands = 0 : i64, tpu.core_type = #tpu.core_type<tc>, window_params = [{transform_indices = @transform_0, window_bounds = array<i64: 8, 128>}, {transform_indices = @transform_1, window_bounds = array<i64: 128, 256>}, {transform_indices = @transform_2, window_bounds = array<i64: 1, 256>}, {transform_indices = @transform_3, window_bounds = array<i64: 8, 1>}, {transform_indices = @transform_4, window_bounds = array<i64: 8, 1>}, {transform_indices = @transform_5, window_bounds = array<i64: 8, 1>}, {transform_indices = @transform_6, window_bounds = array<i64: 8, 256>}]} {
    %c0 = arith.constant 0 : index
    %c0_0 = arith.constant 0 : index
    %0 = vector.load %arg2[%c0, %c0_0] : memref<8x128xbf16, #tpu.memory_space<vmem>>, vector<8x128xbf16>
    %c0_1 = arith.constant 0 : index
    %c0_2 = arith.constant 0 : index
    %1 = vector.load %arg3[%c0_1, %c0_2] : memref<128x256xbf16, #tpu.memory_space<vmem>>, vector<128x256xbf16>
    %cst = arith.constant dense<0.000000e+00> : vector<8x256xf32>
    %2 = tpu.matmul %0, %1, %cst {dimension_numbers = #tpu.dot_dimension_numbers<[1], [0], [0], [1], [0, 0, 1, 1], [], []>} : vector<8x128xbf16>, vector<128x256xbf16>, vector<8x256xf32> -> vector<8x256xf32>
    %c0_3 = arith.constant 0 : index
    %c0_4 = arith.constant 0 : index
    %3 = vector.load %arg5[%c0_3, %c0_4] : memref<8x1xf32, #tpu.memory_space<vmem>>, vector<8x1xf32>
    %c0_5 = arith.constant 0 : index
    %c0_6 = arith.constant 0 : index
    %4 = vector.load %arg6[%c0_5, %c0_6] : memref<8x1xf32, #tpu.memory_space<vmem>>, vector<8x1xf32>
    %c0_7 = arith.constant 0 : index
    %c0_8 = arith.constant 0 : index
    %5 = vector.load %arg4[%c0_7, %c0_8] : memref<1x256xf32, #tpu.memory_space<vmem>>, vector<1x256xf32>
    %6 = vector.broadcast %3 : vector<8x1xf32> to vector<8x256xf32>
    %7 = arith.mulf %2, %6 : vector<8x256xf32>
    %8 = vector.broadcast %5 : vector<1x256xf32> to vector<8x256xf32>
    %9 = arith.mulf %7, %8 : vector<8x256xf32>
    %cst_9 = arith.constant -1.000000e+00 : f32
    %cst_10 = arith.constant 1.000000e+00 : f32
    %10 = vector.broadcast %cst_9 : f32 to vector<8x256xf32>
    %11 = arith.maximumf %10, %9 : vector<8x256xf32>
    %12 = vector.broadcast %cst_10 : f32 to vector<8x256xf32>
    %13 = arith.minimumf %12, %11 : vector<8x256xf32>
    %14 = vector.broadcast %4 : vector<8x1xf32> to vector<8x256xf32>
    %15 = arith.mulf %13, %14 : vector<8x256xf32>
    %c0_11 = arith.constant 0 : index
    %c0_12 = arith.constant 0 : index
    %16 = vector.load %arg7[%c0_11, %c0_12] : memref<8x1xi32, #tpu.memory_space<vmem>>, vector<8x1xi32>
    %17 = tpu.iota {dimensions = array<i32: 1>} : vector<8x256xi32>
    %c256_i32 = arith.constant 256 : i32
    %18 = arith.muli %arg1, %c256_i32 : i32
    %19 = vector.broadcast %18 : i32 to vector<8x256xi32>
    %20 = arith.addi %17, %19 : vector<8x256xi32>
    %21 = vector.broadcast %16 : vector<8x1xi32> to vector<8x256xi32>
    %22 = arith.cmpi eq, %20, %21 : vector<8x256xi32>
    %cst_13 = arith.constant 0.000000e+00 : f32
    %23 = vector.broadcast %cst_13 : f32 to vector<8x256xf32>
    %24 = arith.select %22, %13, %23 : vector<8x256xi1>, vector<8x256xf32>
    %cst_14 = arith.constant dense<0.000000e+00> : vector<8xf32>
    %25 = vector.multi_reduction <add>, %24, %cst_14 [1] : vector<8x256xf32> to vector<8xf32>
    %26 = vector.shape_cast %25 : vector<8xf32> to vector<8x1xf32>
    %cst_15 = arith.constant 8.000000e+00 : f32
    %27 = vector.broadcast %cst_15 : f32 to vector<8x1xf32>
    %28 = arith.mulf %27, %26 : vector<8x1xf32>
    %29 = arith.mulf %28, %26 : vector<8x1xf32>
    %cst_16 = arith.constant 8.000000e+00 : f32
    %30 = vector.broadcast %cst_16 : f32 to vector<8x1xf32>
    %31 = arith.subf %29, %30 : vector<8x1xf32>
    %32 = arith.mulf %26, %26 : vector<8x1xf32>
    %33 = arith.mulf %31, %32 : vector<8x1xf32>
    %cst_17 = arith.constant 1.000000e+00 : f32
    %34 = vector.broadcast %cst_17 : f32 to vector<8x1xf32>
    %35 = arith.addf %33, %34 : vector<8x1xf32>
    %cst_18 = arith.constant 0.000000e+00 : f32
    %36 = vector.broadcast %cst_18 : f32 to vector<8x1xf32>
    %cst_19 = arith.constant 0.707106769 : f32
    %37 = vector.broadcast %cst_19 : f32 to vector<8x1xf32>
    %38 = arith.cmpf ole, %26, %37 : vector<8x1xf32>
    %39 = arith.extui %38 : vector<8x1xi1> to vector<8x1xi32>
    %40 = arith.sitofp %39 : vector<8x1xi32> to vector<8x1xf32>
    %41 = arith.addf %36, %40 : vector<8x1xf32>
    %cst_20 = arith.constant 1.79489656E-9 : f32
    %42 = vector.broadcast %cst_20 : f32 to vector<8x1xf32>
    %43 = arith.cmpf ole, %26, %42 : vector<8x1xf32>
    %44 = arith.extui %43 : vector<8x1xi1> to vector<8x1xi32>
    %45 = arith.sitofp %44 : vector<8x1xi32> to vector<8x1xf32>
    %46 = arith.addf %41, %45 : vector<8x1xf32>
    %cst_21 = arith.constant -0.707106769 : f32
    %47 = vector.broadcast %cst_21 : f32 to vector<8x1xf32>
    %48 = arith.cmpf ole, %26, %47 : vector<8x1xf32>
    %49 = arith.extui %48 : vector<8x1xi1> to vector<8x1xi32>
    %50 = arith.sitofp %49 : vector<8x1xi32> to vector<8x1xf32>
    %51 = arith.addf %46, %50 : vector<8x1xf32>
    %cst_22 = arith.constant -1.000000e+00 : f32
    %52 = vector.broadcast %cst_22 : f32 to vector<8x1xf32>
    %53 = arith.cmpf ole, %26, %52 : vector<8x1xf32>
    %54 = arith.extui %53 : vector<8x1xi1> to vector<8x1xi32>
    %55 = arith.sitofp %54 : vector<8x1xi32> to vector<8x1xf32>
    %56 = arith.addf %51, %55 : vector<8x1xf32>
    %cst_23 = arith.constant 5.000000e-01 : f32
    %57 = vector.broadcast %cst_23 : f32 to vector<8x1xf32>
    %58 = arith.mulf %57, %56 : vector<8x1xf32>
    %59 = math.floor %58 : vector<8x1xf32>
    %cst_24 = arith.constant 2.000000e+00 : f32
    %60 = vector.broadcast %cst_24 : f32 to vector<8x1xf32>
    %61 = arith.mulf %60, %59 : vector<8x1xf32>
    %62 = arith.subf %56, %61 : vector<8x1xf32>
    %cst_25 = arith.constant 2.000000e+00 : f32
    %63 = vector.broadcast %cst_25 : f32 to vector<8x1xf32>
    %64 = arith.mulf %63, %62 : vector<8x1xf32>
    %cst_26 = arith.constant 1.000000e+00 : f32
    %65 = vector.broadcast %cst_26 : f32 to vector<8x1xf32>
    %66 = arith.subf %65, %64 : vector<8x1xf32>
    %67 = arith.mulf %66, %35 : vector<8x1xf32>
    %cst_27 = arith.constant 2.000000e+00 : f32
    %68 = vector.broadcast %cst_27 : f32 to vector<8x1xf32>
    %69 = arith.mulf %68, %56 : vector<8x1xf32>
    %70 = arith.subf %67, %69 : vector<8x1xf32>
    %71 = arith.subf %70, %26 : vector<8x1xf32>
    %cst_28 = arith.constant 7.327960e-04 : f32
    %72 = vector.broadcast %cst_28 : f32 to vector<8x1xf32>
    %73 = arith.mulf %4, %72 : vector<8x1xf32>
    %74 = arith.mulf %71, %73 : vector<8x1xf32>
    %75 = vector.broadcast %74 : vector<8x1xf32> to vector<8x256xf32>
    %76 = arith.addf %15, %75 : vector<8x256xf32>
    %77 = arith.select %22, %76, %15 : vector<8x256xi1>, vector<8x256xf32>
    %c0_29 = arith.constant 0 : index
    %c0_30 = arith.constant 0 : index
    %78 = vector.load %arg8[%c0_29, %c0_30] : memref<8x256xf32, #tpu.memory_space<vmem>>, vector<8x256xf32>
    tpu.vector_store %arg8[%c0_29, %c0_30], %77 {strides = array<i32>} : memref<8x256xf32, #tpu.memory_space<vmem>>, vector<8x256xf32>,
    return
  }
  func.func @transform_0(%arg0: i32, %arg1: i32) -> (i32, i32) {
    %c0_i32 = arith.constant 0 : i32
    %c0_i32_0 = arith.constant 0 : i32
    return %arg0, %c0_i32 : i32, i32
  }
  func.func @transform_1(%arg0: i32, %arg1: i32) -> (i32, i32) {
    %c0_i32 = arith.constant 0 : i32
    %c0_i32_0 = arith.constant 0 : i32
    return %c0_i32, %arg1 : i32, i32
  }
  func.func @transform_2(%arg0: i32, %arg1: i32) -> (i32, i32) {
    %c0_i32 = arith.constant 0 : i32
    %c0_i32_0 = arith.constant 0 : i32
    return %c0_i32, %arg1 : i32, i32
  }
  func.func @transform_3(%arg0: i32, %arg1: i32) -> (i32, i32) {
    %c0_i32 = arith.constant 0 : i32
    %c0_i32_0 = arith.constant 0 : i32
    return %arg0, %c0_i32 : i32, i32
  }
  func.func @transform_4(%arg0: i32, %arg1: i32) -> (i32, i32) {
    %c0_i32 = arith.constant 0 : i32
    %c0_i32_0 = arith.constant 0 : i32
    return %arg0, %c0_i32 : i32, i32
  }
  func.func @transform_5(%arg0: i32, %arg1: i32) -> (i32, i32) {
    %c0_i32 = arith.constant 0 : i32
    %c0_i32_0 = arith.constant 0 : i32
    return %arg0, %c0_i32 : i32, i32
  }
  func.func @transform_6(%arg0: i32, %arg1: i32) -> (i32, i32) {
    %c0_i32 = arith.constant 0 : i32
    return %arg0, %arg1 : i32, i32
  }
}

</mosaic_0001>

<llo_original>
// kernel: tpu_custom_call.1
$region0: #{tpu_custom_call.1}
  #allocation0 [shape = 'u32[]', space=smem, size = 0x4, offset = 0x4, fixed_abs, tag = 'smem constant byte address 0x4 - core index']
  #allocation1 [shape = 'u32[72,128]{1,0:T(1,128)}', space=vmem, size = 0x9000, scoped, tag = 'internal scratch']
  %s0 = inlined_call_operand.vmem [shape: bf16[8,128], index: 0, kind: input, shape index: {}]
  %s1 = inlined_call_operand.hbm [shape: bf16[128,256], index: 1, kind: input, shape index: {}]
  %s2 = inlined_call_operand.vmem [shape: f32[1,256], index: 2, kind: input, shape index: {}]
  %s3 = inlined_call_operand.vmem [shape: f32[8,1], index: 3, kind: input, shape index: {}]
  %s4 = inlined_call_operand.vmem [shape: f32[8,1], index: 4, kind: input, shape index: {}]
  %s5 = inlined_call_operand.vmem [shape: s32[8,1], index: 5, kind: input, shape index: {}]
  %s6 = inlined_call_operand.hbm [shape: f32[8,256], index: 6, kind: output, shape index: {}]
  %s7 = sld [smem:[#allocation0]]
  $region38: #{tpu_custom_call.1} parent=0
    _
  %s9 = ssub.s32 1, %s7
  %s10 = scalar_select 0, %s9, %s7
  $region1: #{tpu_custom_call.1} parent=0
    #allocation2 [shape = 'u8[65536]{0}', space=vmem, size = 0x10000, scoped, tag = 'input window, operand 1, single buffered']
    #allocation3 [shape = 's32[1]{0}', space=sflag, size = 0x4, scoped, tag = 'scoped memory for tpu_custom_call.1']
    #allocation4 [shape = 's32[1]{0}', space=sflag, size = 0x4, scoped, tag = 'scoped memory for tpu_custom_call.1']
    #allocation5 [shape = 'u8[8192]{0}', space=vmem, size = 0x2000, scoped, tag = 'output window, operand 0, single buffered']
    %11 = vsyncpa [#allocation3], 0
    %12 = vsyncpa [#allocation4], 0
    // Predicated region
    $region2: #{tpu_custom_call.1} parent=1 // pred_check
      _
    $region3: #{tpu_custom_call.1} parent=1 // pred_check_branch
      %14 = sbr.rel (0) target = $region5
    $region4: #{tpu_custom_call.1} parent=1 // pred_region
      _
    $region5: #{tpu_custom_call.1} parent=1 // pred_fallthru
      _
    // Predicated region
    $region6: #{tpu_custom_call.1} parent=1 // pred_check
      _
    $region7: #{tpu_custom_call.1} parent=1 // pred_check_branch
      %16 = sbr.rel (0) target = $region9
    $region8: #{tpu_custom_call.1} parent=1 // pred_region
      %18 = vsyncadd [#allocation3], 0
      %s19 = sshll.u32 %s1, 4
      %s20 = int_to_ptr.hbm [resolvable:$true] %s19
      %s21 = sshll.u32 [#allocation2], 4
      %s22 = int_to_ptr.vmem [resolvable:$true] %s21
      %27 = dma.hbm_to_vmem [thread:$0]  %s20, 2048, %s22, [#allocation3], 128, 128, 8
    $region9: #{tpu_custom_call.1} parent=1 // pred_fallthru
      _
    // Predicated region
    $region10: #{tpu_custom_call.1} parent=1 // pred_check
      _
    $region11: #{tpu_custom_call.1} parent=1 // pred_check_branch
      %29 = sbr.rel (0) target = $region13
    $region12: #{tpu_custom_call.1} parent=1 // pred_region
      _
    $region13: #{tpu_custom_call.1} parent=1 // pred_fallthru
      _
    // Predicated region
    $region14: #{tpu_custom_call.1} parent=1 // pred_check
      _
    $region15: #{tpu_custom_call.1} parent=1 // pred_check_branch
      %31 = sbr.rel (0) target = $region17
    $region16: #{tpu_custom_call.1} parent=1 // pred_region
      _
    $region17: #{tpu_custom_call.1} parent=1 // pred_fallthru
      _
    // Predicated region
    $region18: #{tpu_custom_call.1} parent=1 // pred_check
      _
    $region19: #{tpu_custom_call.1} parent=1 // pred_check_branch
      %33 = sbr.rel (0) target = $region21
    $region20: #{tpu_custom_call.1} parent=1 // pred_region
      _
    $region21: #{tpu_custom_call.1} parent=1 // pred_fallthru
      _
    // Predicated region
    $region22: #{tpu_custom_call.1} parent=1 // pred_check
      _
    $region23: #{tpu_custom_call.1} parent=1 // pred_check_branch
      %35 = sbr.rel (0) target = $region25
    $region24: #{tpu_custom_call.1} parent=1 // pred_region
      _
    $region25: #{tpu_custom_call.1} parent=1 // pred_fallthru
      _
    // Predicated region
    $region26: #{tpu_custom_call.1} parent=1 // pred_check
      _
    $region27: #{tpu_custom_call.1} parent=1 // pred_check_branch
      %37 = sbr.rel (0) target = $region29
    $region28: #{tpu_custom_call.1} parent=1 // pred_region
      %39 = dma.done [#allocation3], 2048
    $region29: #{tpu_custom_call.1} parent=1 // pred_fallthru
      _
    %v40 = vld [vmem:[%s0] sm:$0xf]
    %v41 = vld [vmem:[#allocation2] sm:$0xff]
    %v42 = vld [vmem:[#allocation2 + $0x8] sm:$0xff]
    %v43 = vld [vmem:[#allocation2 + $0x10] sm:$0xff]
    %v44 = vld [vmem:[#allocation2 + $0x18] sm:$0xff]
    %v45 = vld [vmem:[#allocation2 + $0x20] sm:$0xff]
    %v46 = vld [vmem:[#allocation2 + $0x28] sm:$0xff]
    %v47 = vld [vmem:[#allocation2 + $0x30] sm:$0xff]
    %v48 = vld [vmem:[#allocation2 + $0x38] sm:$0xff]
    %v49 = vld [vmem:[#allocation2 + $0x40] sm:$0xff]
    %v50 = vld [vmem:[#allocation2 + $0x48] sm:$0xff]
    %v51 = vld [vmem:[#allocation2 + $0x50] sm:$0xff]
    %v52 = vld [vmem:[#allocation2 + $0x58] sm:$0xff]
    %v53 = vld [vmem:[#allocation2 + $0x60] sm:$0xff]
    %v54 = vld [vmem:[#allocation2 + $0x68] sm:$0xff]
    %v55 = vld [vmem:[#allocation2 + $0x70] sm:$0xff]
    %v56 = vld [vmem:[#allocation2 + $0x78] sm:$0xff]
    %v73 = vunpack.c.l.b16 %v41
    %v74 = vunpack.c.h.b16 %v41
    %v75 = vunpack.c.l.b16 %v42
    %v76 = vunpack.c.h.b16 %v42
    %v77 = vunpack.c.l.b16 %v43
    %v78 = vunpack.c.h.b16 %v43
    %v79 = vunpack.c.l.b16 %v44
    %v80 = vunpack.c.h.b16 %v44
    %v81 = vunpack.c.l.b16 %v45
    %v82 = vunpack.c.h.b16 %v45
    %v83 = vunpack.c.l.b16 %v46
    %v84 = vunpack.c.h.b16 %v46
    %v85 = vunpack.c.l.b16 %v47
    %v86 = vunpack.c.h.b16 %v47
    %v87 = vunpack.c.l.b16 %v48
    %v88 = vunpack.c.h.b16 %v48
    %v89 = vunpack.c.l.b16 %v49
    %v90 = vunpack.c.h.b16 %v49
    %v91 = vunpack.c.l.b16 %v50
    %v92 = vunpack.c.h.b16 %v50
    %v93 = vunpack.c.l.b16 %v51
    %v94 = vunpack.c.h.b16 %v51
    %v95 = vunpack.c.l.b16 %v52
    %v96 = vunpack.c.h.b16 %v52
    %v97 = vunpack.c.l.b16 %v53
    %v98 = vunpack.c.h.b16 %v53
    %v99 = vunpack.c.l.b16 %v54
    %v100 = vunpack.c.h.b16 %v54
    %v101 = vunpack.c.l.b16 %v55
    %v102 = vunpack.c.h.b16 %v55
    %v103 = vunpack.c.l.b16 %v56
    %v104 = vunpack.c.h.b16 %v56
    %v105 = vpack.c.b16 %v75, %v73
    %v106 = vpack.c.b16 %v76, %v74
    %v107 = vpack.c.b16 %v79, %v77
    %v108 = vpack.c.b16 %v80, %v78
    %v109 = vpack.c.b16 %v83, %v81
    %v110 = vpack.c.b16 %v84, %v82
    %v111 = vpack.c.b16 %v87, %v85
    %v112 = vpack.c.b16 %v88, %v86
    %v113 = vpack.c.b16 %v91, %v89
    %v114 = vpack.c.b16 %v92, %v90
    %v115 = vpack.c.b16 %v95, %v93
    %v116 = vpack.c.b16 %v96, %v94
    %v117 = vpack.c.b16 %v99, %v97
    %v118 = vpack.c.b16 %v100, %v98
    %v119 = vpack.c.b16 %v103, %v101
    %v120 = vpack.c.b16 %v104, %v102
    %137 = vmatpush.bf16.msra.mxu0 %v119
    %138 = vmatpush.bf16.msra.mxu0 %v117
    %139 = vmatpush.bf16.msra.mxu0 %v115
    %140 = vmatpush.bf16.msra.mxu0 %v113
    %141 = vmatpush.bf16.msra.mxu0 %v111
    %142 = vmatpush.bf16.msra.mxu0 %v109
    %143 = vmatpush.bf16.msra.mxu0 %v107
    %144 = vmatpush.bf16.msra.mxu0 %v105
    %145 = vmatmul.bf16.gmra.mxu0 %v40
    %v146 = vpop.f32.mrf.mxu0
    %v147 = vadd.f32 0.0, %v146
    %v148 = vpop.f32.mrf.mxu0
    %149 = vdwg.mxu0
    %150 = vmatpush.bf16.msra.mxu0 %v120
    %151 = vmatpush.bf16.msra.mxu0 %v118
    %152 = vmatpush.bf16.msra.mxu0 %v116
    %153 = vmatpush.bf16.msra.mxu0 %v114
    %154 = vmatpush.bf16.msra.mxu0 %v112
    %155 = vmatpush.bf16.msra.mxu0 %v110
    %156 = vmatpush.bf16.msra.mxu0 %v108
    %157 = vmatpush.bf16.msra.mxu0 %v106
    %158 = vmatmul.bf16.gmra.mxu0 %v40
    %v159 = vpop.f32.mrf.mxu0
    %v160 = vadd.f32 0.0, %v159
    %v161 = vpop.f32.mrf.mxu0
    %162 = vdwg.mxu0
    %v163 = vld [vmem:[%s3] sm:$0xff]
    %v164 = vld [vmem:[%s4] sm:$0xff]
    %v165 = vld [vmem:[%s2] sm:$0x3]
    %167 = vset.pattern.permute.xlu0 0
    %168 = vperm.xlu0 %167, %v163
    %v169 = vpop.permute.xlu0 %168
    %v171 = vmul.f32 %v147, %v169
    %v172 = vmul.f32 %v160, %v169
    %v174 = vperm.slane %v165, 0
    %v175 = vperm.slane %v165, 1
    %v178 = vmul.f32 %v171, %v174
    %v179 = vmul.f32 %v172, %v175
    %v180 = vmax.f32 %v178, -1.0
    %v181 = vmax.f32 %v179, -1.0
    %v182 = vmin.f32 %v180, 1.0
    %v183 = vmin.f32 %v181, 1.0
    %185 = vset.pattern.permute.xlu0 0
    %186 = vperm.xlu0 %185, %v164
    %v187 = vpop.permute.xlu0 %186
    %v189 = vmul.f32 %v182, %v187
    %v190 = vmul.f32 %v183, %v187
    %v191 = vld [vmem:[%s5] sm:$0xff]
    %v192 = vlaneseq
    %v193 = vand.u32 %v192, 127
    %v194 = vadd.s32 %v193, 128
    %s195 = smul.u32 0, 256
    %v196 = vstv %s195
    %v197 = vadd.s32 %v193, %v196
    %v198 = vadd.s32 %v194, %v196
    %199 = vset.pattern.permute.xlu0 0
    %200 = vperm.xlu0 %199, %v191
    %v201 = vpop.permute.xlu0 %200
    %vm202 = vcmp.eq.s32.totalorder %v197, %v201
    %vm203 = vcmp.eq.s32.totalorder %v198, %v201
    %v204 = vsel %vm202, %v182, 0.0
    %v205 = vsel %vm203, %v183, 0.0
    %v206 = vadd.f32 %v204, %v205
    %207 = vadd.xlane.f32.xlu0 %v206
    %v208 = vpop.xlane.xlu0 %207
    %v209 = vmul.f32 %v208, 8.0
    %v210 = vmul.f32 %v209, %v208
    %v211 = vsub.f32 %v210, 8.0
    %v212 = vmul.f32 %v208, %v208
    %v213 = vmul.f32 %v211, %v212
    %v214 = vadd.f32 %v213, 1.0
    %vm215 = vcmp.le.f32.partialorder %v208, 0.70710677
    %v216 = vsel %vm215, 1, 0
    %v217 = vcvt.s32.f32 %v216
    %v218 = vadd.f32 %v217, 0.0
    %vm219 = vcmp.le.f32.partialorder %v208, 1.7948966e-09
    %v220 = vsel %vm219, 1, 0
    %v221 = vcvt.s32.f32 %v220
    %v222 = vadd.f32 %v218, %v221
    %vm223 = vcmp.le.f32.partialorder %v208, -0.70710677
    %v224 = vsel %vm223, 1, 0
    %v225 = vcvt.s32.f32 %v224
    %v226 = vadd.f32 %v222, %v225
    %vm227 = vcmp.le.f32.partialorder %v208, -1.0
    %v228 = vsel %vm227, 1, 0
    %v229 = vcvt.s32.f32 %v228
    %v230 = vadd.f32 %v226, %v229
    %v231 = vmul.f32 %v230, 0.5
    %v232 = vfloor.f32 %v231
    %v233 = vmul.f32 %v232, 2.0
    %v234 = vsub.f32 %v230, %v233
    %v235 = vmul.f32 %v234, 2.0
    %v236 = vsub.f32 1.0, %v235
    %v237 = vmul.f32 %v236, %v214
    %v238 = vmul.f32 %v230, 2.0
    %v239 = vsub.f32 %v237, %v238
    %v240 = vsub.f32 %v239, %v208
    %v241 = vmul.f32 %v164, 0.000732796
    %v242 = vmul.f32 %v240, %v241
    %244 = vset.pattern.permute.xlu0 0
    %245 = vperm.xlu0 %244, %v242
    %v246 = vpop.permute.xlu0 %245
    %v248 = vadd.f32 %v189, %v246
    %v249 = vadd.f32 %v190, %v246
    %v250 = vsel %vm202, %v248, %v189
    %v251 = vsel %vm203, %v249, %v190
    %252 = vst [vmem:[#allocation5] sm:$0xff] %v250
    %253 = vst [vmem:[#allocation5 + $0x8] sm:$0xff] %v251
    // Predicated region
    $region30: #{tpu_custom_call.1} parent=1 // pred_check
      _
    $region31: #{tpu_custom_call.1} parent=1 // pred_check_branch
      %255 = sbr.rel (0) target = $region33
    $region32: #{tpu_custom_call.1} parent=1 // pred_region
      %257 = vsyncadd [#allocation4], 0
      %s259 = sshll.u32 [#allocation5], 4
      %s260 = int_to_ptr.vmem [resolvable:$true] %s259
      %s261 = sshll.u32 %s6, 4
      %s262 = int_to_ptr.hbm [resolvable:$true] %s261
      %264 = dma.vmem_to_hbm [thread:$0]  %s260, 256, %s262, [#allocation4]
    $region33: #{tpu_custom_call.1} parent=1 // pred_fallthru
      _
    // Predicated region
    $region34: #{tpu_custom_call.1} parent=1 // pred_check
      _
    $region35: #{tpu_custom_call.1} parent=1 // pred_check_branch
      %266 = sbr.rel (0) target = $region37
    $region36: #{tpu_custom_call.1} parent=1 // pred_region
      %268 = dma.done [#allocation4], 256
    $region37: #{tpu_custom_call.1} parent=1 // pred_fallthru
      _
    %269 = vsyncpa [#allocation3], 1
    %270 = vsyncpa [#allocation4], 1

</llo_original>
